<compile_context>
chip_gen: v7x
topology: tpu7x:2x2x1
jax: 0.10.0
libtpu: 0.0.40
codegen_flags: <defaults>
</compile_context>

<pallas_src>
import jax
import jax.numpy as jnp
from jax.experimental import pallas as pl
from jax.experimental.pallas import tpu as pltpu


def _round_up(x, m):
    return ((x + m - 1) // m) * m


def classifier_kernel(x_ref, w_ref, b_ref, mask_ref, out_ref):
    """One row-tile: MXU linear(H->1) + bias + sigmoid + mask, fused."""
    x = x_ref[...]                                   # (TILE_M, H) f32
    w = w_ref[...]                                   # (H, 128) f32, only col 0 nonzero
    # MXU contraction over H; result (TILE_M, 128).  Keep lane 0 only.
    h_full = jnp.dot(x, w, preferred_element_type=jnp.float32)
    h = h_full[:, 0:1] + b_ref[0]                    # (TILE_M, 1), bias from SMEM
    s = jax.nn.sigmoid(h)
    out_ref[...] = jnp.where(mask_ref[...] != 0, s, jnp.zeros_like(s))


def classifier_forward(inputs, mask_cls, weight, bias, *, tile_m=None):
    """inputs: (B,S,H) f32, mask_cls: (B,S) int/bool, weight: (1,H), bias: (1,)."""
    B, S, H = inputs.shape
    M = B * S

    # Free metadata reshapes (row-major contiguous); no HBM copies of the big array.
    x2d = inputs.reshape(M, H)
    mask2d = mask_cls.reshape(M, 1)
    if mask2d.dtype == jnp.bool_:
        mask2d = mask2d.astype(jnp.int32)

    # nn.Linear weight is (1, H); lay it out as (H, 128) with the real weight in
    # lane 0 and zeros elsewhere so the MXU sees a standard full-width tile.
    w_col = weight.reshape(H).astype(jnp.float32)
    w_pad = jnp.zeros((H, 128), jnp.float32).at[:, 0].set(w_col)
    bias1 = bias.reshape(1).astype(jnp.float32)

    if tile_m is None:
        # 1024 rows * H * 4B per buffer (x2 double-buffering) stays comfortably
        # inside v7x's 32 MiB scoped-VMEM default for H up to a few thousand.
        # v6e/v5e have more headroom; 1024 is a safe cross-generation default.
        tile_m = 1024 if M >= 1024 else _round_up(M, 8)

    grid = (pl.cdiv(M, tile_m),)

    out = pl.pallas_call(
        classifier_kernel,
        out_shape=jax.ShapeDtypeStruct((M, 1), jnp.float32),
        grid_spec=pltpu.PrefetchScalarGridSpec(
            num_scalar_prefetch=0,
            grid=grid,
            in_specs=[
                # Input row-tile: the only large stream (HBM-bandwidth bound).
                pl.BlockSpec((tile_m, H), lambda i: (i, 0)),
                # Weight tile: grid-invariant, DMA'd once and kept resident.
                pl.BlockSpec((H, 128), lambda i: (0, 0)),
                # Scalar bias in SMEM (scalar unit adds it for free).
                pl.BlockSpec(memory_space=pltpu.MemorySpace.SMEM),
                # Mask row-tile (int), cast/selected in-kernel.
                pl.BlockSpec((tile_m, 1), lambda i: (i, 0)),
            ],
            out_specs=pl.BlockSpec((tile_m, 1), lambda i: (i, 0)),
        ),
        compiler_params=pltpu.CompilerParams(
            dimension_semantics=("parallel",),   # shard row-tiles across TCs (v7x)
        ),
        cost_estimate=pl.CostEstimate(
            flops=2 * M * H,
            transcendentals=M,
            bytes_accessed=4 * M * H + 4 * M + 4 * M + 4 * H * 128,
        ),
    )(x2d, w_pad, bias1, mask2d)

    return out.reshape(B, S)


if __name__ == "__main__":
    B, S, H = 2, 8, 32   # batch=2, num_sentences=8, hidden=32
    key = jax.random.PRNGKey(0)
    k_in, k_w, k_b, k_m = jax.random.split(key, 4)

    inputs = jax.random.normal(k_in, (B, S, H), dtype=jnp.float32)

    # Deterministic synthetic params matching nn.Linear(hidden_size, 1):
    bound = 1.0 / (H ** 0.5)
    weight = jax.random.uniform(k_w, (1, H), minval=-bound, maxval=bound,
                                dtype=jnp.float32)
    bias = jax.random.uniform(k_b, (1,), minval=-bound, maxval=bound,
                              dtype=jnp.float32)

    # mask_cls: 0/1 sentence mask
    mask_cls = (jax.random.uniform(k_m, (B, S)) > 0.3).astype(jnp.int32)

    out = classifier_forward(inputs, mask_cls, weight, bias)
    out = jax.block_until_ready(out)

    # pure-JAX reference of the PyTorch forward
    ref_h = jnp.einsum("bsh,oh->bso", inputs, weight,
                       precision=jax.lax.Precision.HIGHEST)[..., 0] + bias[0]
    ref = jax.nn.sigmoid(ref_h) * mask_cls.astype(jnp.float32)
    assert out.shape == (B, S)
    assert jnp.allclose(out, ref, atol=1e-4, rtol=1e-4), "mismatch vs reference"

    print("KERNEL_OK")
</pallas_src>

<mosaic_0001>
module attributes {stable_mosaic.version = 11 : i64} {
  func.func @classifier_kernel(%arg0: i32, %arg1: memref<16x32xf32, #tpu.memory_space<vmem>>, %arg2: memref<32x128xf32, #tpu.memory_space<vmem>>, %arg3: memref<1xf32, #tpu.memory_space<smem>>, %arg4: memref<16x1xi32, #tpu.memory_space<vmem>>, %arg5: memref<16x1xf32, #tpu.memory_space<vmem>>) attributes {dimension_semantics = [#tpu.dimension_semantics<parallel>], iteration_bounds = array<i64: 1>, scalar_prefetch = 0 : i64, scratch_operands = 0 : i64, tpu.core_type = #tpu.core_type<tc>, window_params = [{transform_indices = @transform_0, window_bounds = array<i64: 16, 32>}, {pipeline_mode = #tpu.pipeline_mode<synchronous>, transform_indices = @transform_1, window_bounds = array<i64: 32, 128>}, {transform_indices = @transform_2, window_bounds = array<i64: 1>}, {transform_indices = @transform_3, window_bounds = array<i64: 16, 1>}, {transform_indices = @transform_4, window_bounds = array<i64: 16, 1>}]} {
    %c0 = arith.constant 0 : index
    %c0_0 = arith.constant 0 : index
    %0 = vector.load %arg1[%c0, %c0_0] : memref<16x32xf32, #tpu.memory_space<vmem>>, vector<16x32xf32>
    %c0_1 = arith.constant 0 : index
    %c0_2 = arith.constant 0 : index
    %1 = vector.load %arg2[%c0_1, %c0_2] : memref<32x128xf32, #tpu.memory_space<vmem>>, vector<32x128xf32>
    %cst = arith.constant dense<0.000000e+00> : vector<16x128xf32>
    %2 = tpu.matmul %0, %1, %cst {dimension_numbers = #tpu.dot_dimension_numbers<[1], [0], [0], [1], [0, 0, 1, 1], [], []>} : vector<16x32xf32>, vector<32x128xf32>, vector<16x128xf32> -> vector<16x128xf32>
    %3 = vector.extract_strided_slice %2 {offsets = [0, 0], sizes = [16, 1], strides = [1, 1]} : vector<16x128xf32> to vector<16x1xf32>
    %c0_3 = arith.constant 0 : index
    %4 = memref.load %arg3[%c0_3] : memref<1xf32, #tpu.memory_space<smem>>
    %5 = vector.broadcast %4 : f32 to vector<16x1xf32>
    %6 = arith.addf %3, %5 : vector<16x1xf32>
    %7 = arith.negf %6 : vector<16x1xf32>
    %8 = math.exp %7 : vector<16x1xf32>
    %cst_4 = arith.constant 1.000000e+00 : f32
    %9 = vector.broadcast %cst_4 : f32 to vector<16x1xf32>
    %10 = arith.addf %9, %8 : vector<16x1xf32>
    %11 = arith.divf %9, %10 : vector<16x1xf32>
    %c0_5 = arith.constant 0 : index
    %c0_6 = arith.constant 0 : index
    %12 = vector.load %arg4[%c0_5, %c0_6] : memref<16x1xi32, #tpu.memory_space<vmem>>, vector<16x1xi32>
    %c0_i32 = arith.constant 0 : i32
    %13 = vector.broadcast %c0_i32 : i32 to vector<16x1xi32>
    %14 = arith.cmpi ne, %12, %13 : vector<16x1xi32>
    %cst_7 = arith.constant 0.000000e+00 : f32
    %15 = vector.broadcast %cst_7 : f32 to vector<16x1xf32>
    %16 = arith.select %14, %11, %15 : vector<16x1xi1>, vector<16x1xf32>
    %c0_8 = arith.constant 0 : index
    %c0_9 = arith.constant 0 : index
    %17 = vector.load %arg5[%c0_8, %c0_9] : memref<16x1xf32, #tpu.memory_space<vmem>>, vector<16x1xf32>
    tpu.vector_store %arg5[%c0_8, %c0_9], %16 {strides = array<i32>} : memref<16x1xf32, #tpu.memory_space<vmem>>, vector<16x1xf32>,
    return
  }
  func.func @transform_0(%arg0: i32) -> (i32, i32) {
    %c0_i32 = arith.constant 0 : i32
    %c0_i32_0 = arith.constant 0 : i32
    return %arg0, %c0_i32 : i32, i32
  }
  func.func @transform_1(%arg0: i32) -> (i32, i32) {
    %c0_i32 = arith.constant 0 : i32
    %c0_i32_0 = arith.constant 0 : i32
    %c0_i32_1 = arith.constant 0 : i32
    return %c0_i32, %c0_i32_0 : i32, i32
  }
  func.func @transform_2(%arg0: i32) -> i32 {
    %c0_i32 = arith.constant 0 : i32
    %c0_i32_0 = arith.constant 0 : i32
    return %c0_i32 : i32
  }
  func.func @transform_3(%arg0: i32) -> (i32, i32) {
    %c0_i32 = arith.constant 0 : i32
    %c0_i32_0 = arith.constant 0 : i32
    return %arg0, %c0_i32 : i32, i32
  }
  func.func @transform_4(%arg0: i32) -> (i32, i32) {
    %c0_i32 = arith.constant 0 : i32
    %c0_i32_0 = arith.constant 0 : i32
    return %arg0, %c0_i32 : i32, i32
  }
}

</mosaic_0001>

<llo_original>
// kernel: tpu_custom_call.1
$region0: #{tpu_custom_call.1}
  #allocation0 [shape = 'u32[]', space=smem, size = 0x4, offset = 0x4, fixed_abs, tag = 'smem constant byte address 0x4 - core index']
  #allocation1 [shape = 'u32[144,128]{1,0:T(1,128)}', space=vmem, size = 0x12000, scoped, tag = 'internal scratch']
  #allocation2 [shape = 'f32[1]{0:T(128)S(6)}', space=smem, size = 0x200, scoped, tag = 'scoped memory for tpu_custom_call.1']
  %s0 = inlined_call_operand.vmem [shape: f32[16,32], index: 0, kind: input, shape index: {}]
  %s1 = inlined_call_operand.hbm [shape: f32[32,128], index: 1, kind: input, shape index: {}]
  %s2 = inlined_call_operand.<no memory space> [shape: f32[1], index: 2, kind: input, shape index: {}]
  %s3 = inlined_call_operand.vmem [shape: s32[16,1], index: 3, kind: input, shape index: {}]
  %s4 = inlined_call_operand.vmem [shape: f32[16,1], index: 4, kind: output, shape index: {}]
  %s5 = sld [smem:[#allocation0]]
  $region30: #{tpu_custom_call.1} parent=0
    _
  %s7 = ssub.s32 1, %s5
  %s8 = scalar_select 0, %s7, %s5
  %9 = sst [smem:[#allocation2]] %s2
  $region1: #{tpu_custom_call.1} parent=0
    #allocation3 [shape = 'u8[16384]{0}', space=vmem, size = 0x4000, scoped, tag = 'input window, operand 1, single buffered']
    #allocation4 [shape = 's32[1]{0}', space=sflag, size = 0x4, scoped, tag = 'scoped memory for tpu_custom_call.1']
    %10 = vsyncpa [#allocation4], 0
    // Predicated region
    $region2: #{tpu_custom_call.1} parent=1 // pred_check
      _
    $region3: #{tpu_custom_call.1} parent=1 // pred_check_branch
      %12 = sbr.rel (0) target = $region5
    $region4: #{tpu_custom_call.1} parent=1 // pred_region
      _
    $region5: #{tpu_custom_call.1} parent=1 // pred_fallthru
      _
    // Predicated region
    $region6: #{tpu_custom_call.1} parent=1 // pred_check
      _
    $region7: #{tpu_custom_call.1} parent=1 // pred_check_branch
      %14 = sbr.rel (0) target = $region9
    $region8: #{tpu_custom_call.1} parent=1 // pred_region
      %s16 = ssub.s32 512, 512
      %17 = vsyncadd [#allocation4], %s16
      %s18 = sshll.u32 [#allocation3], 4
      %s19 = int_to_ptr.vmem [resolvable:$true] %s18
      %24 = dma.hbm_to_vmem [thread:$0]  %s1, 512, %s19, [#allocation4], 128, 128, 8
    $region9: #{tpu_custom_call.1} parent=1 // pred_fallthru
      _
    // Predicated region
    $region10: #{tpu_custom_call.1} parent=1 // pred_check
      _
    $region11: #{tpu_custom_call.1} parent=1 // pred_check_branch
      %26 = sbr.rel (0) target = $region13
    $region12: #{tpu_custom_call.1} parent=1 // pred_region
      _
    $region13: #{tpu_custom_call.1} parent=1 // pred_fallthru
      _
    // Predicated region
    $region14: #{tpu_custom_call.1} parent=1 // pred_check
      _
    $region15: #{tpu_custom_call.1} parent=1 // pred_check_branch
      %28 = sbr.rel (0) target = $region17
    $region16: #{tpu_custom_call.1} parent=1 // pred_region
      _
    $region17: #{tpu_custom_call.1} parent=1 // pred_fallthru
      _
    // Predicated region
    $region18: #{tpu_custom_call.1} parent=1 // pred_check
      _
    $region19: #{tpu_custom_call.1} parent=1 // pred_check_branch
      %30 = sbr.rel (0) target = $region21
    $region20: #{tpu_custom_call.1} parent=1 // pred_region
      %31 = dma.done [#allocation4], 512
    $region21: #{tpu_custom_call.1} parent=1 // pred_fallthru
      _
    %v32 = vld [vmem:[%s0] sm:$0xff]
    %v33 = vld [vmem:[%s0 + $0x8] sm:$0xff]
    %v34 = vld [vmem:[#allocation3] sm:$0xff]
    %v35 = vld [vmem:[#allocation3 + $0x8] sm:$0xff]
    %v36 = vld [vmem:[#allocation3 + $0x10] sm:$0xff]
    %v37 = vld [vmem:[#allocation3 + $0x18] sm:$0xff]
    %vm38 = vcmask 261120
    %v40 = vsel %vm38, %v32, 0
    %v43 = vsel %vm38, %v33, 0
    %45 = vmatprep.subr.mxu0 0.0
    %46 = vmatpush1.msra.mxu0 %v34
    %47 = vmatprep.subr.mxu0 0.0
    %48 = vmatpush1.msra.mxu0 %v35
    %49 = vmatprep.subr.mxu0 0.0
    %50 = vmatpush1.msra.mxu0 %v36
    %51 = vmatprep.subr.mxu0 0.0
    %52 = vmatpush1.msra.mxu0 %v37
    %53 = vmatprep.subr.mxu0 0.0
    %54 = vmatpush1.msra.mxu0 0.0
    %55 = vmatprep.subr.mxu0 0.0
    %56 = vmatpush1.msra.mxu0 0.0
    %57 = vmatprep.subr.mxu0 0.0
    %58 = vmatpush1.msra.mxu0 0.0
    %59 = vmatprep.subr.mxu0 0.0
    %60 = vmatpush1.msra.mxu0 0.0
    %61 = vmatprep.subr.mxu0 0.0
    %62 = vmatpush1.msra.mxu0 0.0
    %63 = vmatprep.subr.mxu0 0.0
    %64 = vmatpush1.msra.mxu0 0.0
    %65 = vmatprep.subr.mxu0 0.0
    %66 = vmatpush1.msra.mxu0 0.0
    %67 = vmatprep.subr.mxu0 0.0
    %68 = vmatpush1.msra.mxu0 0.0
    %69 = vmatprep.subr.mxu0 0.0
    %70 = vmatpush1.msra.mxu0 0.0
    %71 = vmatprep.subr.mxu0 0.0
    %72 = vmatpush1.msra.mxu0 0.0
    %73 = vmatprep.subr.mxu0 0.0
    %74 = vmatpush1.msra.mxu0 0.0
    %75 = vmatprep.subr.mxu0 0.0
    %76 = vmatpush1.msra.mxu0 0.0
    %77 = vmatprep.subr.mxu0 0.0
    %78 = vmatpush1.msra.mxu0 0.0
    %79 = vmatprep.subr.mxu0 0.0
    %80 = vmatpush1.msra.mxu0 0.0
    %81 = vmatprep.subr.mxu0 0.0
    %82 = vmatpush1.msra.mxu0 0.0
    %83 = vmatprep.subr.mxu0 0.0
    %84 = vmatpush1.msra.mxu0 0.0
    %85 = vmatprep.subr.mxu0 0.0
    %86 = vmatpush1.msra.mxu0 0.0
    %87 = vmatprep.subr.mxu0 0.0
    %88 = vmatpush1.msra.mxu0 0.0
    %89 = vmatprep.subr.mxu0 0.0
    %90 = vmatpush1.msra.mxu0 0.0
    %91 = vmatprep.subr.mxu0 0.0
    %92 = vmatpush1.msra.mxu0 0.0
    %93 = vmatprep.subr.mxu0 0.0
    %94 = vmatpush1.msra.mxu0 0.0
    %95 = vmatprep.subr.mxu0 0.0
    %96 = vmatpush1.msra.mxu0 0.0
    %97 = vmatprep.subr.mxu0 0.0
    %98 = vmatpush1.msra.mxu0 0.0
    %99 = vmatprep.subr.mxu0 0.0
    %100 = vmatpush1.msra.mxu0 0.0
    %101 = vmatprep.subr.mxu0 0.0
    %102 = vmatpush1.msra.mxu0 0.0
    %103 = vmatprep.subr.mxu0 0.0
    %104 = vmatpush1.msra.mxu0 0.0
    %105 = vmatprep.subr.mxu0 0.0
    %106 = vmatpush1.msra.mxu0 0.0
    %107 = vmatprep.subr.mxu0 0.0
    %108 = vmatpush1.msra.mxu0 0.0
    %109 = vmatprep.mubr.f32.mxu0 0.0
    %110 = vmatmul.mubr.f32.gmra.mrb[0].mxu0 %v40
    %v111 = vpop.f32.mrb[0].mxu0
    %v112 = vadd.f32 0.0, %v111
    %v113 = vpop.f32.mrb[0].mxu0
    %114 = vmatprep.mubr.f32.mxu0 0.0
    %115 = vmatmul.mubr.f32.gmra.mrb[0].mxu0 %v43
    %v116 = vpop.f32.mrb[0].mxu0
    %v117 = vadd.f32 0.0, %v116
    %v118 = vpop.f32.mrb[0].mxu0
    %119 = vdwg.mxu0
    %s120 = sld [smem:[#allocation2]]
    %v121 = vstv %s120
    %v122 = vadd.f32 %v112, %v121
    %v123 = vadd.f32 %v117, %v121
    %v124 = vxor.u32 %v122, 2147483648
    %v125 = vxor.u32 %v123, 2147483648
    %v126 = vmul.f32 %v124, 1.442695
    %v127 = vpow.pop %v126
    %v128 = vmul.f32 %v125, 1.442695
    %v129 = vpow.pop %v128
    %v130 = vadd.f32 %v127, 1.0
    %v131 = vadd.f32 %v129, 1.0
    %v132 = vrcp.pop %v130
    %v133 = vmul.f32 1.0, %v132
    %v134 = vrcp.pop %v131
    %v135 = vmul.f32 1.0, %v134
    %v136 = vld [vmem:[%s3] sm:$0xff]
    %v137 = vld [vmem:[%s3 + $0x8] sm:$0xff]
    %vm138 = vcmp.ne.s32.totalorder %v136, 0
    %vm139 = vcmp.ne.s32.totalorder %v137, 0
    %v140 = vsel %vm138, %v133, 0.0
    %v141 = vsel %vm139, %v135, 0.0
    %vm142 = vcmask 7168
    %143 = vst.msk [vmem:[%s4] sm:$0xff] %vm142, %v140
    %144 = vst.msk [vmem:[%s4 + $0x8] sm:$0xff] %vm142, %v141
    // Predicated region
    $region22: #{tpu_custom_call.1} parent=1 // pred_check
      _
    $region23: #{tpu_custom_call.1} parent=1 // pred_check_branch
      %146 = sbr.rel (0) target = $region25
    $region24: #{tpu_custom_call.1} parent=1 // pred_region
      _
    $region25: #{tpu_custom_call.1} parent=1 // pred_fallthru
      _
    // Predicated region
    $region26: #{tpu_custom_call.1} parent=1 // pred_check
      _
    $region27: #{tpu_custom_call.1} parent=1 // pred_check_branch
      %148 = sbr.rel (0) target = $region29
    $region28: #{tpu_custom_call.1} parent=1 // pred_region
      _
    $region29: #{tpu_custom_call.1} parent=1 // pred_fallthru
      _
    %149 = vsyncpa [#allocation4], 1

</llo_original>
